<compile_context>
chip_gen: v5e
topology: v5e:2x2
jax: 0.10.0
libtpu: 0.0.40
codegen_flags: <defaults>
</compile_context>

<pallas_src>
import functools

import jax
import jax.numpy as jnp
from jax.experimental import pallas as pl
from jax.experimental.pallas import tpu as pltpu

_LANES = 128
_SUBLANES = 8


def _mbce_kernel(x_ref, t_ref, o_ref, acc_ref, *,
                 alpha, eps, block_rows, num_blocks, tiles_per_core,
                 tail_valid, needs_mask, has_grid_pad):
    c = pl.program_id(0)          # core (parallel) axis
    t = pl.program_id(1)          # sequential reduction axis
    gb = c * tiles_per_core + t   # global block index

    @pl.when(t == 0)
    def _():
        acc_ref[...] = jnp.zeros_like(acc_ref)

    x = x_ref[...].astype(jnp.float32)
    tg = t_ref[...].astype(jnp.float32)

    # clamp(inputs, eps, 1 - eps)
    x = jnp.clip(x, eps, 1.0 - eps)

    log_x = jnp.log(x)
    log_1mx = jnp.log(1.0 - x)
    b = 1.0 - alpha
    # contrib = alpha*t*log(x) + (1-alpha)*(1-t)*log(1-x)   (negated + scaled in the wrapper)
    contrib = tg * (alpha * log_x - b * log_1mx) + b * log_1mx

    def _fold(v):
        # Sublane-group fold into the resident (8, 128) accumulator (pure vreg adds).
        if block_rows == _SUBLANES:
            return v
        return jnp.sum(v.reshape(block_rows // _SUBLANES, _SUBLANES, _LANES), axis=0)

    if needs_mask:
        if num_blocks > 1:
            @pl.when(gb < num_blocks - 1)
            def _():
                acc_ref[...] += _fold(contrib)

        @pl.when(gb == num_blocks - 1)
        def _():
            # Only the globally-last block can contain lane padding / stale partial-block rows.
            row = jax.lax.broadcasted_iota(jnp.int32, (block_rows, _LANES), 0)
            col = jax.lax.broadcasted_iota(jnp.int32, (block_rows, _LANES), 1)
            lidx = row * _LANES + col
            acc_ref[...] += _fold(jnp.where(lidx < tail_valid, contrib, 0.0))
    else:
        if has_grid_pad:
            @pl.when(gb < num_blocks)
            def _():
                acc_ref[...] += _fold(contrib)
        else:
            acc_ref[...] += _fold(contrib)

    @pl.when(t == pl.num_programs(1) - 1)
    def _():
        o_ref[0] = acc_ref[...]   # per-core lane-dense partial sum


def modified_binary_cross_entropy(inputs, targets, *, alpha=0.7, eps=1e-6,
                                  max_block_rows=2048, num_cores=2):
    """inputs, targets: arrays of identical (arbitrary) shape. Returns scalar mean loss (f32)."""
    assert inputs.shape == targets.shape, (inputs.shape, targets.shape)
    n = int(inputs.size)
    assert n > 0

    flat_x = inputs.reshape(-1)
    flat_t = targets.reshape(-1)

    rows = pl.cdiv(n, _LANES)
    pad_lanes = rows * _LANES - n
    if pad_lanes:
        # TODO(synk): sub-128 remainders need one pad copy; sizes that are multiples of 128
        # take the zero-copy path (grid-level partial blocks are handled by Pallas + mask).
        flat_x = jnp.pad(flat_x, (0, pad_lanes))
        flat_t = jnp.pad(flat_t, (0, pad_lanes))

    x2 = flat_x.reshape(rows, _LANES)
    t2 = flat_t.reshape(rows, _LANES)

    max_block_rows = max(_SUBLANES, (int(max_block_rows) // _SUBLANES) * _SUBLANES)
    block_rows = min(max_block_rows,
                     ((rows + _SUBLANES - 1) // _SUBLANES) * _SUBLANES)
    num_blocks = pl.cdiv(rows, block_rows)
    num_cores = int(num_cores) if num_blocks >= 2 else 1
    tiles_per_core = pl.cdiv(num_blocks, num_cores)
    has_grid_pad = (num_cores * tiles_per_core != num_blocks)

    covered = num_blocks * block_rows * _LANES
    needs_mask = covered != n
    tail_valid = n - (num_blocks - 1) * block_rows * _LANES  # valid elems in the last block

    kernel = functools.partial(
        _mbce_kernel,
        alpha=float(alpha), eps=float(eps),
        block_rows=block_rows, num_blocks=num_blocks, tiles_per_core=tiles_per_core,
        tail_valid=tail_valid, needs_mask=needs_mask, has_grid_pad=has_grid_pad)

    # Two inputs, double-buffered, plus small acc/output; raise scoped VMEM if user asks for
    # very large blocks (v5e default is only 16 MiB).
    in_block_bytes = block_rows * _LANES * (x2.dtype.itemsize + t2.dtype.itemsize) * 2
    vmem_limit = int(min(max(2 * in_block_bytes + (2 << 20), 32 << 20), 64 << 20))

    def in_map(c, t):
        # Clamp padding grid steps (gb >= num_blocks) onto the last real block; their
        # contribution is discarded in-kernel.
        return (jnp.minimum(c * tiles_per_core + t, num_blocks - 1), 0)

    partials = pl.pallas_call(
        kernel,
        out_shape=jax.ShapeDtypeStruct((num_cores, _SUBLANES, _LANES), jnp.float32),
        grid=(num_cores, tiles_per_core),
        in_specs=[
            pl.BlockSpec((block_rows, _LANES), in_map),
            pl.BlockSpec((block_rows, _LANES), in_map),
        ],
        out_specs=pl.BlockSpec((1, _SUBLANES, _LANES), lambda c, t: (c, 0, 0)),
        scratch_shapes=[pltpu.VMEM((_SUBLANES, _LANES), jnp.float32)],
        compiler_params=pltpu.CompilerParams(
            dimension_semantics=("parallel", "arbitrary"),
            vmem_limit_bytes=vmem_limit),
    )(x2, t2)

    total = jnp.sum(partials, dtype=jnp.float32)
    return (-total / jnp.float32(n)).astype(jnp.float32)


def _reference(inputs, targets, alpha=0.7, eps=1e-6):
    x = jnp.clip(inputs.astype(jnp.float32), eps, 1.0 - eps)
    t = targets.astype(jnp.float32)
    loss = -(alpha * t * jnp.log(x) + (1.0 - alpha) * (1.0 - t) * jnp.log(1.0 - x))
    return jnp.mean(loss)


if __name__ == "__main__":
    key = jax.random.PRNGKey(0)
    k1, k2, k3, k4, k5, k6, k7, k8 = jax.random.split(key, 8)

    # Test 1: small, non-128-aligned shape -> single partial block + lane-tail mask.
    inputs1 = jax.random.uniform(k1, (4, 100), dtype=jnp.float32, minval=0.0, maxval=1.0)
    targets1 = jax.random.bernoulli(k2, 0.5, (4, 100)).astype(jnp.float32)
    out1 = jax.block_until_ready(modified_binary_cross_entropy(inputs1, targets1))
    ref1 = _reference(inputs1, targets1)
    assert out1.shape == (), out1.shape
    assert jnp.allclose(out1, ref1, atol=1e-5, rtol=1e-5), f"test1: {out1} vs {ref1}"

    # Test 2: multi-step grid (small max_block_rows) + 2-core split + grid padding + tail mask.
    inputs2 = jax.random.uniform(k3, (8, 1111), dtype=jnp.float32, minval=0.0, maxval=1.0)
    targets2 = jax.random.bernoulli(k4, 0.3, (8, 1111)).astype(jnp.float32)
    out2 = jax.block_until_ready(
        modified_binary_cross_entropy(inputs2, targets2, max_block_rows=16))
    ref2 = _reference(inputs2, targets2)
    assert jnp.allclose(out2, ref2, atol=1e-5, rtol=1e-5), f"test2: {out2} vs {ref2}"

    # Test 3: fully aligned shape -> zero-copy path, no mask, unconditional accumulate.
    inputs3 = jax.random.uniform(k5, (16, 256), dtype=jnp.float32, minval=0.0, maxval=1.0)
    targets3 = jax.random.bernoulli(k6, 0.5, (16, 256)).astype(jnp.float32)
    out3 = jax.block_until_ready(modified_binary_cross_entropy(inputs3, targets3))
    ref3 = _reference(inputs3, targets3)
    assert jnp.allclose(out3, ref3, atol=1e-5, rtol=1e-5), f"test3: {out3} vs {ref3}"

    # Test 4: bf16 inputs/targets streamed from HBM (halved bandwidth), f32 math in-kernel.
    inputs4 = jax.random.uniform(k7, (8, 512), dtype=jnp.float32,
                                 minval=0.0, maxval=1.0).astype(jnp.bfloat16)
    targets4 = jax.random.bernoulli(k8, 0.5, (8, 512)).astype(jnp.bfloat16)
    out4 = jax.block_until_ready(modified_binary_cross_entropy(inputs4, targets4))
    ref4 = _reference(inputs4, targets4)
    assert jnp.allclose(out4, ref4, atol=1e-4, rtol=1e-4), f"test4: {out4} vs {ref4}"

    print("KERNEL_OK")
</pallas_src>

<mosaic_0001>
module attributes {stable_mosaic.version = 11 : i64} {
  func.func @_mbce_kernel(%arg0: i32, %arg1: i32, %arg2: memref<8x128xf32, #tpu.memory_space<vmem>>, %arg3: memref<8x128xf32, #tpu.memory_space<vmem>>, %arg4: memref<1x8x128xf32, #tpu.memory_space<vmem>>, %arg5: memref<8x128xf32, #tpu.memory_space<vmem>>) attributes {dimension_semantics = [#tpu.dimension_semantics<parallel>, #tpu.dimension_semantics<arbitrary>], iteration_bounds = array<i64: 1, 1>, scalar_prefetch = 0 : i64, scratch_operands = 1 : i64, tpu.core_type = #tpu.core_type<tc>, window_params = [{transform_indices = @transform_0, window_bounds = array<i64: 8, 128>}, {transform_indices = @transform_1, window_bounds = array<i64: 8, 128>}, {transform_indices = @transform_2, window_bounds = array<i64: 1, 8, 128>}]} {
    %c1_i32 = arith.constant 1 : i32
    %0 = arith.muli %arg0, %c1_i32 : i32
    %1 = arith.addi %0, %arg1 : i32
    %c0_i32 = arith.constant 0 : i32
    %2 = arith.cmpi eq, %arg1, %c0_i32 : i32
    %3 = arith.extui %2 : i1 to i32
    %c0_i32_0 = arith.constant 0 : i32
    %4 = arith.cmpi ne, %3, %c0_i32_0 : i32
    scf.if %4 {
      %cst_13 = arith.constant 0.000000e+00 : f32
      %30 = vector.broadcast %cst_13 : f32 to vector<8x128xf32>
      %c0_14 = arith.constant 0 : index
      %c0_15 = arith.constant 0 : index
      %31 = vector.load %arg5[%c0_14, %c0_15] : memref<8x128xf32, #tpu.memory_space<vmem>>, vector<8x128xf32>
      tpu.vector_store %arg5[%c0_14, %c0_15], %30 {strides = array<i32>} : memref<8x128xf32, #tpu.memory_space<vmem>>, vector<8x128xf32>,
    } else {
    }
    %c0 = arith.constant 0 : index
    %c0_1 = arith.constant 0 : index
    %5 = vector.load %arg2[%c0, %c0_1] : memref<8x128xf32, #tpu.memory_space<vmem>>, vector<8x128xf32>
    %c0_2 = arith.constant 0 : index
    %c0_3 = arith.constant 0 : index
    %6 = vector.load %arg3[%c0_2, %c0_3] : memref<8x128xf32, #tpu.memory_space<vmem>>, vector<8x128xf32>
    %cst = arith.constant 9.99999997E-7 : f32
    %cst_4 = arith.constant 0.999998986 : f32
    %7 = vector.broadcast %cst : f32 to vector<8x128xf32>
    %8 = arith.maximumf %7, %5 : vector<8x128xf32>
    %9 = vector.broadcast %cst_4 : f32 to vector<8x128xf32>
    %10 = arith.minimumf %9, %8 : vector<8x128xf32>
    %11 = math.log %10 : vector<8x128xf32>
    %cst_5 = arith.constant 1.000000e+00 : f32
    %12 = vector.broadcast %cst_5 : f32 to vector<8x128xf32>
    %13 = arith.subf %12, %10 : vector<8x128xf32>
    %14 = math.log %13 : vector<8x128xf32>
    %cst_6 = arith.constant 0.699999988 : f32
    %15 = vector.broadcast %cst_6 : f32 to vector<8x128xf32>
    %16 = arith.mulf %15, %11 : vector<8x128xf32>
    %cst_7 = arith.constant 3.000000e-01 : f32
    %17 = vector.broadcast %cst_7 : f32 to vector<8x128xf32>
    %18 = arith.mulf %17, %14 : vector<8x128xf32>
    %19 = arith.subf %16, %18 : vector<8x128xf32>
    %20 = arith.mulf %6, %19 : vector<8x128xf32>
    %cst_8 = arith.constant 3.000000e-01 : f32
    %21 = vector.broadcast %cst_8 : f32 to vector<8x128xf32>
    %22 = arith.mulf %21, %14 : vector<8x128xf32>
    %23 = arith.addf %20, %22 : vector<8x128xf32>
    %c0_i32_9 = arith.constant 0 : i32
    %24 = arith.cmpi eq, %1, %c0_i32_9 : i32
    %25 = arith.extui %24 : i1 to i32
    %c0_i32_10 = arith.constant 0 : i32
    %26 = arith.cmpi ne, %25, %c0_i32_10 : i32
    scf.if %26 {
      %30 = tpu.iota {dimensions = array<i32: 0>} : vector<8x128xi32>
      %31 = tpu.iota {dimensions = array<i32: 1>} : vector<8x128xi32>
      %c128_i32 = arith.constant 128 : i32
      %32 = vector.broadcast %c128_i32 : i32 to vector<8x128xi32>
      %33 = arith.muli %30, %32 : vector<8x128xi32>
      %34 = arith.addi %33, %31 : vector<8x128xi32>
      %c0_13 = arith.constant 0 : index
      %c0_14 = arith.constant 0 : index
      %35 = vector.load %arg5[%c0_13, %c0_14] : memref<8x128xf32, #tpu.memory_space<vmem>>, vector<8x128xf32>
      %c400_i32 = arith.constant 400 : i32
      %36 = vector.broadcast %c400_i32 : i32 to vector<8x128xi32>
      %37 = arith.cmpi slt, %34, %36 : vector<8x128xi32>
      %cst_15 = arith.constant 0.000000e+00 : f32
      %38 = vector.broadcast %cst_15 : f32 to vector<8x128xf32>
      %39 = arith.select %37, %23, %38 : vector<8x128xi1>, vector<8x128xf32>
      %40 = arith.addf %35, %39 : vector<8x128xf32>
      %c0_16 = arith.constant 0 : index
      %c0_17 = arith.constant 0 : index
      %41 = vector.load %arg5[%c0_16, %c0_17] : memref<8x128xf32, #tpu.memory_space<vmem>>, vector<8x128xf32>
      tpu.vector_store %arg5[%c0_16, %c0_17], %40 {strides = array<i32>} : memref<8x128xf32, #tpu.memory_space<vmem>>, vector<8x128xf32>,
    } else {
    }
    %c0_i32_11 = arith.constant 0 : i32
    %27 = arith.cmpi eq, %arg1, %c0_i32_11 : i32
    %28 = arith.extui %27 : i1 to i32
    %c0_i32_12 = arith.constant 0 : i32
    %29 = arith.cmpi ne, %28, %c0_i32_12 : i32
    scf.if %29 {
      %c0_13 = arith.constant 0 : index
      %c0_14 = arith.constant 0 : index
      %30 = vector.load %arg5[%c0_13, %c0_14] : memref<8x128xf32, #tpu.memory_space<vmem>>, vector<8x128xf32>
      %c0_15 = arith.constant 0 : index
      %c0_16 = arith.constant 0 : index
      %c0_17 = arith.constant 0 : index
      %31 = vector.load %arg4[%c0_15, %c0_16, %c0_17] : memref<1x8x128xf32, #tpu.memory_space<vmem>>, vector<1x8x128xf32>
      %32 = vector.shape_cast %31 : vector<1x8x128xf32> to vector<8x128xf32>
      %33 = vector.shape_cast %30 : vector<8x128xf32> to vector<1x8x128xf32>
      tpu.vector_store %arg4[%c0_15, %c0_16, %c0_17], %33 {strides = array<i32>} : memref<1x8x128xf32, #tpu.memory_space<vmem>>, vector<1x8x128xf32>,
    } else {
    }
    return
  }
  func.func @transform_0(%arg0: i32, %arg1: i32) -> (i32, i32) {
    %c1_i32 = arith.constant 1 : i32
    %0 = arith.muli %arg0, %c1_i32 : i32
    %1 = arith.addi %0, %arg1 : i32
    %c0_i32 = arith.constant 0 : i32
    %2 = arith.minsi %1, %c0_i32 : i32
    %c0_i32_0 = arith.constant 0 : i32
    %c0_i32_1 = arith.constant 0 : i32
    return %2, %c0_i32_0 : i32, i32
  }
  func.func @transform_1(%arg0: i32, %arg1: i32) -> (i32, i32) {
    %c1_i32 = arith.constant 1 : i32
    %0 = arith.muli %arg0, %c1_i32 : i32
    %1 = arith.addi %0, %arg1 : i32
    %c0_i32 = arith.constant 0 : i32
    %2 = arith.minsi %1, %c0_i32 : i32
    %c0_i32_0 = arith.constant 0 : i32
    %c0_i32_1 = arith.constant 0 : i32
    return %2, %c0_i32_0 : i32, i32
  }
  func.func @transform_2(%arg0: i32, %arg1: i32) -> (i32, i32, i32) {
    %c0_i32 = arith.constant 0 : i32
    %c0_i32_0 = arith.constant 0 : i32
    %c0_i32_1 = arith.constant 0 : i32
    return %arg0, %c0_i32, %c0_i32_0 : i32, i32, i32
  }
}

</mosaic_0001>

<llo_original>
// kernel: tpu_custom_call.1
$region0: #{tpu_custom_call.1}
  #allocation0 [shape = 'u32[]', space=smem, size = 0x4, offset = 0x4, fixed_abs, tag = 'smem constant byte address 0x4 - core index']
  #allocation1 [shape = 'u32[72,128]{1,0:T(1,128)}', space=vmem, size = 0x9000, scoped, tag = 'internal scratch']
  #allocation2 [shape = 'f32[8,128]{1,0:T(8,128)}', space=vmem, size = 0x1000, scoped, tag = 'scratch operand']
  %s0 = inlined_call_operand.hbm [shape: f32[4,128], index: 0, kind: input, shape index: {}]
  %s1 = inlined_call_operand.hbm [shape: f32[4,128], index: 1, kind: input, shape index: {}]
  %s2 = inlined_call_operand.hbm [shape: f32[1,8,128], index: 2, kind: output, shape index: {}]
  %s3 = sld [smem:[#allocation0]]
  $region38: #{tpu_custom_call.1} parent=0
    _
  %s5 = ssub.s32 1, %s3
  %s6 = scalar_select 0, %s5, %s3
  $region1: #{tpu_custom_call.1} parent=0
    #allocation3 [shape = 'u8[4096]{0}', space=vmem, size = 0x1000, scoped, tag = 'input window, operand 0, single buffered']
    #allocation4 [shape = 's32[1]{0}', space=sflag, size = 0x4, scoped, tag = 'scoped memory for tpu_custom_call.1']
    #allocation5 [shape = 's32[1]{0}', space=sflag, size = 0x4, scoped, tag = 'scoped memory for tpu_custom_call.1']
    #allocation6 [shape = 'u8[4096]{0}', space=vmem, size = 0x1000, scoped, tag = 'input window, operand 1, single buffered']
    #allocation7 [shape = 's32[1]{0}', space=sflag, size = 0x4, scoped, tag = 'scoped memory for tpu_custom_call.1']
    #allocation8 [shape = 'u8[4096]{0}', space=vmem, size = 0x1000, scoped, tag = 'output window, operand 0, single buffered']
    %7 = vsyncpa [#allocation4], 0
    %8 = vsyncpa [#allocation7], 0
    %9 = vsyncpa [#allocation5], 0
    // Predicated region
    $region2: #{tpu_custom_call.1} parent=1 // pred_check
      _
    $region3: #{tpu_custom_call.1} parent=1 // pred_check_branch
      %11 = sbr.rel (0) target = $region5
    $region4: #{tpu_custom_call.1} parent=1 // pred_region
      %s12 = sadd.s32 0, 0
      %p13 = scmp.lt.s32.totalorder %s12, 0
      %s14 = scalar_select %p13, %s12, 0
      %s15 = smul.u32 2, %s14
      %s16 = ssub.s32 1, %s15
      %s17 = smul.u32 4, %s16
      %s18 = ssub.s32 8, %s17
      %s19 = sshll.u32 %s18, 4
      %20 = vsyncadd [#allocation4], %s19
      %p21 = scmp.ne.s32.totalorder 0, %s17
      %s22 = smul.addr %s15, 4
      %s23 = scalar_lea.hbm %s0, %s22
      %s24 = smul.u32 4, %s16
      %s25 = sshll.u32 %s23, 4
      %s26 = int_to_ptr.hbm [resolvable:$true] %s25
      %s27 = sshll.u32 [#allocation3], 4
      %s28 = int_to_ptr.vmem [resolvable:$true] %s27
      %s29 = sshll.u32 %s24, 4
      %33 = dma.hbm_to_vmem [thread:$0]  (%p21), %s26, %s29, %s28, [#allocation4], 64, 64, 4
    $region5: #{tpu_custom_call.1} parent=1 // pred_fallthru
      _
    // Predicated region
    $region6: #{tpu_custom_call.1} parent=1 // pred_check
      _
    $region7: #{tpu_custom_call.1} parent=1 // pred_check_branch
      %35 = sbr.rel (0) target = $region9
    $region8: #{tpu_custom_call.1} parent=1 // pred_region
      %s36 = sadd.s32 0, 0
      %p37 = scmp.lt.s32.totalorder %s36, 0
      %s38 = scalar_select %p37, %s36, 0
      %s39 = smul.u32 2, %s38
      %s40 = ssub.s32 1, %s39
      %s41 = smul.u32 4, %s40
      %s42 = ssub.s32 8, %s41
      %s43 = sshll.u32 %s42, 4
      %44 = vsyncadd [#allocation7], %s43
      %p45 = scmp.ne.s32.totalorder 0, %s41
      %s46 = smul.addr %s39, 4
      %s47 = scalar_lea.hbm %s1, %s46
      %s48 = smul.u32 4, %s40
      %s49 = sshll.u32 %s47, 4
      %s50 = int_to_ptr.hbm [resolvable:$true] %s49
      %s51 = sshll.u32 [#allocation6], 4
      %s52 = int_to_ptr.vmem [resolvable:$true] %s51
      %s53 = sshll.u32 %s48, 4
      %57 = dma.hbm_to_vmem [thread:$0]  (%p45), %s50, %s53, %s52, [#allocation7], 64, 64, 4
    $region9: #{tpu_custom_call.1} parent=1 // pred_fallthru
      _
    // Predicated region
    $region10: #{tpu_custom_call.1} parent=1 // pred_check
      _
    $region11: #{tpu_custom_call.1} parent=1 // pred_check_branch
      %59 = sbr.rel (0) target = $region13
    $region12: #{tpu_custom_call.1} parent=1 // pred_region
      %61 = dma.done [#allocation4], 128
    $region13: #{tpu_custom_call.1} parent=1 // pred_fallthru
      _
    // Predicated region
    $region14: #{tpu_custom_call.1} parent=1 // pred_check
      _
    $region15: #{tpu_custom_call.1} parent=1 // pred_check_branch
      %63 = sbr.rel (0) target = $region17
    $region16: #{tpu_custom_call.1} parent=1 // pred_region
      %65 = dma.done [#allocation7], 128
    $region17: #{tpu_custom_call.1} parent=1 // pred_fallthru
      _
    %s66 = sadd.s32 0, 0
    %p67 = scmp.lt.s32.totalorder %s66, 0
    %s68 = scalar_select %p67, %s66, 0
    %s69 = smul.u32 2, %s68
    %s70 = ssub.s32 1, %s69
    %s71 = smul.u32 4, %s70
    %s72 = sadd.s32 0, 0
    %p73 = scmp.lt.s32.totalorder %s72, 0
    %s74 = scalar_select %p73, %s72, 0
    %s75 = smul.u32 2, %s74
    %s76 = ssub.s32 1, %s75
    %s77 = smul.u32 4, %s76
    %s78 = sadd.s32 0, 0
    %p79 = scmp.eq.s32.totalorder 0, 0
    // Predicated region
    $region18: #{tpu_custom_call.1} parent=1 // pred_check
      %p80 = pneg %p79
    $region19: #{tpu_custom_call.1} parent=1 // pred_check_branch
      %82 = sbr.rel (%p80) target = $region21
    $region20: #{tpu_custom_call.1} parent=1 // pred_region
      %83 = vst [vmem:[#allocation2] sm:$0xff] 0.0
    $region21: #{tpu_custom_call.1} parent=1 // pred_fallthru
      _
    %v84 = vld [vmem:[#allocation3] sm:$0xff]
    %v85 = vld [vmem:[#allocation6] sm:$0xff]
    %v86 = vmax.f32 %v84, 1e-06
    %v87 = vmin.f32 %v86, 0.999999
    %v88 = vlog2.pop %v87
    %v89 = vmul.f32 %v88, 0.6931472
    %v90 = vsub.f32 1.0, %v87
    %v91 = vlog2.pop %v90
    %v92 = vmul.f32 %v91, 0.6931472
    %v93 = vmul.f32 %v89, 0.7
    %v94 = vmul.f32 %v92, 0.3
    %v95 = vsub.f32 %v93, %v94
    %v96 = vmul.f32 %v85, %v95
    %v97 = vadd.f32 %v96, %v94
    %p98 = scmp.eq.s32.totalorder %s78, 0
    // Predicated region
    $region22: #{tpu_custom_call.1} parent=1 // pred_check
      %p99 = pneg %p98
    $region23: #{tpu_custom_call.1} parent=1 // pred_check_branch
      %101 = sbr.rel (%p99) target = $region25
    $region24: #{tpu_custom_call.1} parent=1 // pred_region
      %v102 = vlaneseq
      %v103 = vshrl.u32 %v102, 7
      %v104 = vlaneseq
      %v105 = vand.u32 %v104, 127
      %v106 = vmul.u32 %v103, 128
      %v107 = vadd.s32 %v106, %v105
      %v108 = vld [vmem:[#allocation2] sm:$0xff]
      %vm109 = vcmp.lt.s32.totalorder %v107, 400
      %v110 = vsel %vm109, %v97, 0.0
      %v111 = vadd.f32 %v108, %v110
      %112 = vst [vmem:[#allocation2] sm:$0xff] %v111
    $region25: #{tpu_custom_call.1} parent=1 // pred_fallthru
      _
    // Predicated region
    $region26: #{tpu_custom_call.1} parent=1 // pred_check
      %p113 = pneg %p79
    $region27: #{tpu_custom_call.1} parent=1 // pred_check_branch
      %115 = sbr.rel (%p113) target = $region29
    $region28: #{tpu_custom_call.1} parent=1 // pred_region
      %v116 = vld [vmem:[#allocation2] sm:$0xff]
      %117 = vst [vmem:[#allocation8] sm:$0xff] %v116
    $region29: #{tpu_custom_call.1} parent=1 // pred_fallthru
      _
    // Predicated region
    $region30: #{tpu_custom_call.1} parent=1 // pred_check
      _
    $region31: #{tpu_custom_call.1} parent=1 // pred_check_branch
      %119 = sbr.rel (0) target = $region33
    $region32: #{tpu_custom_call.1} parent=1 // pred_region
      %121 = vsyncadd [#allocation5], 0
      %s123 = sshll.u32 [#allocation8], 4
      %s124 = int_to_ptr.vmem [resolvable:$true] %s123
      %s125 = sshll.u32 %s2, 4
      %s126 = int_to_ptr.hbm [resolvable:$true] %s125
      %128 = dma.vmem_to_hbm [thread:$0]  %s124, 128, %s126, [#allocation5]
    $region33: #{tpu_custom_call.1} parent=1 // pred_fallthru
      _
    // Predicated region
    $region34: #{tpu_custom_call.1} parent=1 // pred_check
      _
    $region35: #{tpu_custom_call.1} parent=1 // pred_check_branch
      %130 = sbr.rel (0) target = $region37
    $region36: #{tpu_custom_call.1} parent=1 // pred_region
      %132 = dma.done [#allocation5], 128
    $region37: #{tpu_custom_call.1} parent=1 // pred_fallthru
      _
    %133 = vsyncpa [#allocation4], 1
    %134 = vsyncpa [#allocation7], 1
    %135 = vsyncpa [#allocation5], 1

</llo_original>
